<compile_context>
chip_gen: v5e
topology: v5e:2x2
jax: 0.10.0
libtpu: 0.0.40
codegen_flags: <defaults>
</compile_context>

<pallas_src>
import math

import jax
import jax.numpy as jnp
from jax.experimental import pallas as pl
from jax.experimental.pallas import tpu as pltpu


def _pos_inject_kernel(x_ref, w_ref, b_ref, o_ref):
    # x_ref/o_ref: (H, W, CT)   w_ref: (9, CT)   b_ref: (1, CT)
    H, W, C = x_ref.shape

    x = x_ref[...].astype(jnp.float32)
    w = w_ref[...].astype(jnp.float32)   # (9, CT), loaded once
    b = b_ref[...].astype(jnp.float32)   # (1, CT)

    zero_col = jnp.zeros((H, 1, C), jnp.float32)
    zero_row = jnp.zeros((1, W, C), jnp.float32)

    # Horizontally (W / sublane axis) shifted copies with zero fill:
    #   hs[0][i, j] = x[i, j-1],  hs[1] = x,  hs[2][i, j] = x[i, j+1]
    hs = (
        jnp.concatenate([zero_col, x[:, :W - 1, :]], axis=1),
        x,
        jnp.concatenate([x[:, 1:, :], zero_col], axis=1),
    )

    # Residual + conv bias.
    acc = x + b[0, :]

    # Depthwise 3x3 conv: per kernel row combine the 3 horizontal shifts,
    # then place the combined row with a cheap vertical (leading-axis) shift.
    # Tap k = di*3 + dj corresponds to offsets (di-1, dj-1), matching PyTorch:
    #   out[i, j] += w[di, dj] * x[i + di - 1, j + dj - 1]
    for di in range(3):
        t = (hs[0] * w[di * 3 + 0, :]
             + hs[1] * w[di * 3 + 1, :]
             + hs[2] * w[di * 3 + 2, :])
        oi = di - 1
        if oi == 0:
            acc = acc + t
        elif oi == 1:   # contribution[i] = t[i+1], zero at i = H-1
            acc = acc + jnp.concatenate([t[1:, :, :], zero_row], axis=0)
        else:           # oi == -1: contribution[i] = t[i-1], zero at i = 0
            acc = acc + jnp.concatenate([zero_row, t[:H - 1, :, :]], axis=0)

    o_ref[...] = acc.astype(o_ref.dtype)


def _choose_channel_tile(B, H, C):
    """Lane-dense channel tile when possible; else one full-channel block."""
    if C % 128 != 0:
        # Full-channel block: last block dim == array dim, always legal.
        return C
    # f32 working-array budget per (H, H, CT) tensor -> keeps blocks plus
    # double-buffering comfortably inside scoped VMEM on every generation.
    budget_elems = (2 << 20) // 4
    divisors = [d for d in range(128, C + 1, 128) if C % d == 0]
    if B == 1:
        # Keep >= 2 channel blocks so a parallel axis exists for megacore.
        small = [d for d in divisors if d <= C // 2]
        if small:
            divisors = small
    fitting = [d for d in divisors if H * H * d <= budget_elems]
    return max(fitting) if fitting else min(divisors)


def pos_inject_layer(x, weight, bias):
    """PosInjectLayer forward.

    x: (B, N, C) with N = H*H
    weight: (C, 1, 3, 3)  (PyTorch depthwise Conv2d weight, groups = C)
    bias: (C,)
    returns: (B, N, C)
    """
    B, N, C = x.shape
    H = math.isqrt(N)
    assert H * H == N, f"In PE {H}^2 != {N}"

    CT = _choose_channel_tile(B, H, C)

    x_nhwc = x.reshape(B, H, H, C)
    # (C,1,3,3) -> (3,3,C) -> (9,C); row k corresponds to tap (di,dj)=divmod(k,3)
    w_flat = jnp.transpose(weight[:, 0, :, :], (1, 2, 0)).reshape(9, C)
    b_2d = bias.reshape(1, C)

    out = pl.pallas_call(
        _pos_inject_kernel,
        out_shape=jax.ShapeDtypeStruct((B, H, H, C), x.dtype),
        grid_spec=pltpu.PrefetchScalarGridSpec(
            num_scalar_prefetch=0,
            grid=(B, C // CT),
            in_specs=[
                pl.BlockSpec((None, H, H, CT), lambda b, c: (b, 0, 0, c)),
                pl.BlockSpec((9, CT), lambda b, c: (0, c)),
                pl.BlockSpec((1, CT), lambda b, c: (0, c)),
            ],
            out_specs=pl.BlockSpec((None, H, H, CT), lambda b, c: (b, 0, 0, c)),
        ),
        compiler_params=pltpu.CompilerParams(
            dimension_semantics=("parallel", "parallel")),
    )(x_nhwc, w_flat, b_2d)

    return out.reshape(B, N, C)


def _reference(x, weight, bias):
    """Pure-JAX reference of the PyTorch forward (NHWC math)."""
    B, N, C = x.shape
    H = math.isqrt(N)
    xi = x.reshape(B, H, H, C).astype(jnp.float32)
    xp = jnp.pad(xi, ((0, 0), (1, 1), (1, 1), (0, 0)))
    acc = xi + bias.reshape(1, 1, 1, C)
    for di in range(3):
        for dj in range(3):
            acc = acc + xp[:, di:di + H, dj:dj + H, :] * weight[:, 0, di, dj].reshape(1, 1, 1, C)
    return acc.reshape(B, N, C).astype(x.dtype)


if __name__ == "__main__":
    key = jax.random.PRNGKey(0)

    # Case 1: small, non-multiple-of-128 channels (full-channel block path).
    B, C, H = 2, 32, 8
    N = H * H
    kx, kw, kb = jax.random.split(key, 3)
    x = jax.random.normal(kx, (B, N, C), dtype=jnp.float32)
    weight = 0.1 * jax.random.normal(kw, (C, 1, 3, 3), dtype=jnp.float32)
    bias = 0.1 * jax.random.normal(kb, (C,), dtype=jnp.float32)

    out = jax.block_until_ready(pos_inject_layer(x, weight, bias))
    ref = _reference(x, weight, bias)
    assert out.shape == (B, N, C)
    assert jnp.allclose(out, ref, atol=1e-5, rtol=1e-5), "mismatch vs reference (C=32)"

    # Case 2: lane-dense tiled channel path (C % 128 == 0, B == 1 -> CT = 128).
    B2, C2, H2 = 1, 256, 8
    N2 = H2 * H2
    kx2, kw2, kb2 = jax.random.split(jax.random.PRNGKey(1), 3)
    x2 = jax.random.normal(kx2, (B2, N2, C2), dtype=jnp.float32)
    weight2 = 0.1 * jax.random.normal(kw2, (C2, 1, 3, 3), dtype=jnp.float32)
    bias2 = 0.1 * jax.random.normal(kb2, (C2,), dtype=jnp.float32)

    out2 = jax.block_until_ready(pos_inject_layer(x2, weight2, bias2))
    ref2 = _reference(x2, weight2, bias2)
    assert out2.shape == (B2, N2, C2)
    assert jnp.allclose(out2, ref2, atol=1e-5, rtol=1e-5), "mismatch vs reference (C=256)"

    print("KERNEL_OK")
</pallas_src>

<mosaic_0001>
module attributes {stable_mosaic.version = 11 : i64} {
  func.func @_pos_inject_kernel(%arg0: i32, %arg1: i32, %arg2: memref<1x8x8x32xf32, #tpu.memory_space<vmem>>, %arg3: memref<9x32xf32, #tpu.memory_space<vmem>>, %arg4: memref<1x32xf32, #tpu.memory_space<vmem>>, %arg5: memref<1x8x8x32xf32, #tpu.memory_space<vmem>>) attributes {dimension_semantics = [#tpu.dimension_semantics<parallel>, #tpu.dimension_semantics<parallel>], iteration_bounds = array<i64: 2, 1>, scalar_prefetch = 0 : i64, scratch_operands = 0 : i64, tpu.core_type = #tpu.core_type<tc>, window_params = [{transform_indices = @transform_0, window_bounds = array<i64: 1, 8, 8, 32>}, {transform_indices = @transform_1, window_bounds = array<i64: 9, 32>}, {transform_indices = @transform_2, window_bounds = array<i64: 1, 32>}, {transform_indices = @transform_3, window_bounds = array<i64: 1, 8, 8, 32>}]} {
    %c0 = arith.constant 0 : index
    %c0_0 = arith.constant 0 : index
    %c0_1 = arith.constant 0 : index
    %c0_2 = arith.constant 0 : index
    %0 = vector.load %arg2[%c0, %c0_0, %c0_1, %c0_2] : memref<1x8x8x32xf32, #tpu.memory_space<vmem>>, vector<1x8x8x32xf32>
    %1 = vector.shape_cast %0 : vector<1x8x8x32xf32> to vector<8x8x32xf32>
    %c0_3 = arith.constant 0 : index
    %c0_4 = arith.constant 0 : index
    %2 = vector.load %arg3[%c0_3, %c0_4] : memref<9x32xf32, #tpu.memory_space<vmem>>, vector<9x32xf32>
    %c0_5 = arith.constant 0 : index
    %c0_6 = arith.constant 0 : index
    %3 = vector.load %arg4[%c0_5, %c0_6] : memref<1x32xf32, #tpu.memory_space<vmem>>, vector<1x32xf32>
    %cst = arith.constant 0.000000e+00 : f32
    %4 = vector.broadcast %cst : f32 to vector<8x1x32xf32>
    %cst_7 = arith.constant 0.000000e+00 : f32
    %5 = vector.broadcast %cst_7 : f32 to vector<1x8x32xf32>
    %6 = vector.extract_strided_slice %1 {offsets = [0, 0, 0], sizes = [8, 7, 32], strides = [1, 1, 1]} : vector<8x8x32xf32> to vector<8x7x32xf32>
    %7 = tpu.concatenate %4, %6 in 1 : vector<8x1x32xf32>, vector<8x7x32xf32> -> vector<8x8x32xf32>
    %8 = vector.extract_strided_slice %1 {offsets = [0, 1, 0], sizes = [8, 7, 32], strides = [1, 1, 1]} : vector<8x8x32xf32> to vector<8x7x32xf32>
    %9 = tpu.concatenate %8, %4 in 1 : vector<8x7x32xf32>, vector<8x1x32xf32> -> vector<8x8x32xf32>
    %10 = vector.shape_cast %3 : vector<1x32xf32> to vector<32xf32>
    %11 = vector.shape_cast %10 : vector<32xf32> to vector<1x1x32xf32>
    %12 = vector.broadcast %11 : vector<1x1x32xf32> to vector<8x8x32xf32>
    %13 = arith.addf %1, %12 : vector<8x8x32xf32>
    %14 = vector.extract_strided_slice %2 {offsets = [0, 0], sizes = [1, 32], strides = [1, 1]} : vector<9x32xf32> to vector<1x32xf32>
    %15 = vector.shape_cast %14 : vector<1x32xf32> to vector<32xf32>
    %16 = vector.shape_cast %15 : vector<32xf32> to vector<1x1x32xf32>
    %17 = vector.broadcast %16 : vector<1x1x32xf32> to vector<8x8x32xf32>
    %18 = arith.mulf %7, %17 : vector<8x8x32xf32>
    %19 = vector.extract_strided_slice %2 {offsets = [1, 0], sizes = [1, 32], strides = [1, 1]} : vector<9x32xf32> to vector<1x32xf32>
    %20 = vector.shape_cast %19 : vector<1x32xf32> to vector<32xf32>
    %21 = vector.shape_cast %20 : vector<32xf32> to vector<1x1x32xf32>
    %22 = vector.broadcast %21 : vector<1x1x32xf32> to vector<8x8x32xf32>
    %23 = arith.mulf %1, %22 : vector<8x8x32xf32>
    %24 = arith.addf %18, %23 : vector<8x8x32xf32>
    %25 = vector.extract_strided_slice %2 {offsets = [2, 0], sizes = [1, 32], strides = [1, 1]} : vector<9x32xf32> to vector<1x32xf32>
    %26 = vector.shape_cast %25 : vector<1x32xf32> to vector<32xf32>
    %27 = vector.shape_cast %26 : vector<32xf32> to vector<1x1x32xf32>
    %28 = vector.broadcast %27 : vector<1x1x32xf32> to vector<8x8x32xf32>
    %29 = arith.mulf %9, %28 : vector<8x8x32xf32>
    %30 = arith.addf %24, %29 : vector<8x8x32xf32>
    %31 = vector.extract_strided_slice %30 {offsets = [0, 0, 0], sizes = [7, 8, 32], strides = [1, 1, 1]} : vector<8x8x32xf32> to vector<7x8x32xf32>
    %32 = tpu.concatenate %5, %31 in 0 : vector<1x8x32xf32>, vector<7x8x32xf32> -> vector<8x8x32xf32>
    %33 = arith.addf %13, %32 : vector<8x8x32xf32>
    %34 = vector.extract_strided_slice %2 {offsets = [3, 0], sizes = [1, 32], strides = [1, 1]} : vector<9x32xf32> to vector<1x32xf32>
    %35 = vector.shape_cast %34 : vector<1x32xf32> to vector<32xf32>
    %36 = vector.shape_cast %35 : vector<32xf32> to vector<1x1x32xf32>
    %37 = vector.broadcast %36 : vector<1x1x32xf32> to vector<8x8x32xf32>
    %38 = arith.mulf %7, %37 : vector<8x8x32xf32>
    %39 = vector.extract_strided_slice %2 {offsets = [4, 0], sizes = [1, 32], strides = [1, 1]} : vector<9x32xf32> to vector<1x32xf32>
    %40 = vector.shape_cast %39 : vector<1x32xf32> to vector<32xf32>
    %41 = vector.shape_cast %40 : vector<32xf32> to vector<1x1x32xf32>
    %42 = vector.broadcast %41 : vector<1x1x32xf32> to vector<8x8x32xf32>
    %43 = arith.mulf %1, %42 : vector<8x8x32xf32>
    %44 = arith.addf %38, %43 : vector<8x8x32xf32>
    %45 = vector.extract_strided_slice %2 {offsets = [5, 0], sizes = [1, 32], strides = [1, 1]} : vector<9x32xf32> to vector<1x32xf32>
    %46 = vector.shape_cast %45 : vector<1x32xf32> to vector<32xf32>
    %47 = vector.shape_cast %46 : vector<32xf32> to vector<1x1x32xf32>
    %48 = vector.broadcast %47 : vector<1x1x32xf32> to vector<8x8x32xf32>
    %49 = arith.mulf %9, %48 : vector<8x8x32xf32>
    %50 = arith.addf %44, %49 : vector<8x8x32xf32>
    %51 = arith.addf %33, %50 : vector<8x8x32xf32>
    %52 = vector.extract_strided_slice %2 {offsets = [6, 0], sizes = [1, 32], strides = [1, 1]} : vector<9x32xf32> to vector<1x32xf32>
    %53 = vector.shape_cast %52 : vector<1x32xf32> to vector<32xf32>
    %54 = vector.shape_cast %53 : vector<32xf32> to vector<1x1x32xf32>
    %55 = vector.broadcast %54 : vector<1x1x32xf32> to vector<8x8x32xf32>
    %56 = arith.mulf %7, %55 : vector<8x8x32xf32>
    %57 = vector.extract_strided_slice %2 {offsets = [7, 0], sizes = [1, 32], strides = [1, 1]} : vector<9x32xf32> to vector<1x32xf32>
    %58 = vector.shape_cast %57 : vector<1x32xf32> to vector<32xf32>
    %59 = vector.shape_cast %58 : vector<32xf32> to vector<1x1x32xf32>
    %60 = vector.broadcast %59 : vector<1x1x32xf32> to vector<8x8x32xf32>
    %61 = arith.mulf %1, %60 : vector<8x8x32xf32>
    %62 = arith.addf %56, %61 : vector<8x8x32xf32>
    %63 = vector.extract_strided_slice %2 {offsets = [8, 0], sizes = [1, 32], strides = [1, 1]} : vector<9x32xf32> to vector<1x32xf32>
    %64 = vector.shape_cast %63 : vector<1x32xf32> to vector<32xf32>
    %65 = vector.shape_cast %64 : vector<32xf32> to vector<1x1x32xf32>
    %66 = vector.broadcast %65 : vector<1x1x32xf32> to vector<8x8x32xf32>
    %67 = arith.mulf %9, %66 : vector<8x8x32xf32>
    %68 = arith.addf %62, %67 : vector<8x8x32xf32>
    %69 = vector.extract_strided_slice %68 {offsets = [1, 0, 0], sizes = [7, 8, 32], strides = [1, 1, 1]} : vector<8x8x32xf32> to vector<7x8x32xf32>
    %70 = tpu.concatenate %69, %5 in 0 : vector<7x8x32xf32>, vector<1x8x32xf32> -> vector<8x8x32xf32>
    %71 = arith.addf %51, %70 : vector<8x8x32xf32>
    %c0_8 = arith.constant 0 : index
    %c0_9 = arith.constant 0 : index
    %c0_10 = arith.constant 0 : index
    %c0_11 = arith.constant 0 : index
    %72 = vector.load %arg5[%c0_8, %c0_9, %c0_10, %c0_11] : memref<1x8x8x32xf32, #tpu.memory_space<vmem>>, vector<1x8x8x32xf32>
    %73 = vector.shape_cast %72 : vector<1x8x8x32xf32> to vector<8x8x32xf32>
    %74 = vector.shape_cast %71 : vector<8x8x32xf32> to vector<1x8x8x32xf32>
    tpu.vector_store %arg5[%c0_8, %c0_9, %c0_10, %c0_11], %74 {strides = array<i32>} : memref<1x8x8x32xf32, #tpu.memory_space<vmem>>, vector<1x8x8x32xf32>,
    return
  }
  func.func @transform_0(%arg0: i32, %arg1: i32) -> (i32, i32, i32, i32) {
    %c0_i32 = arith.constant 0 : i32
    %c0_i32_0 = arith.constant 0 : i32
    %c0_i32_1 = arith.constant 0 : i32
    return %arg0, %c0_i32, %c0_i32_0, %arg1 : i32, i32, i32, i32
  }
  func.func @transform_1(%arg0: i32, %arg1: i32) -> (i32, i32) {
    %c0_i32 = arith.constant 0 : i32
    %c0_i32_0 = arith.constant 0 : i32
    return %c0_i32, %arg1 : i32, i32
  }
  func.func @transform_2(%arg0: i32, %arg1: i32) -> (i32, i32) {
    %c0_i32 = arith.constant 0 : i32
    %c0_i32_0 = arith.constant 0 : i32
    return %c0_i32, %arg1 : i32, i32
  }
  func.func @transform_3(%arg0: i32, %arg1: i32) -> (i32, i32, i32, i32) {
    %c0_i32 = arith.constant 0 : i32
    %c0_i32_0 = arith.constant 0 : i32
    %c0_i32_1 = arith.constant 0 : i32
    return %arg0, %c0_i32, %c0_i32_0, %arg1 : i32, i32, i32, i32
  }
}

</mosaic_0001>

<llo_original>
// kernel: tpu_custom_call.1
$region0: #{tpu_custom_call.1}
  #allocation0 [shape = 'u32[]', space=smem, size = 0x4, offset = 0x4, fixed_abs, tag = 'smem constant byte address 0x4 - core index']
  #allocation1 [shape = 'u32[72,128]{1,0:T(1,128)}', space=vmem, size = 0x9000, scoped, tag = 'internal scratch']
  %s0 = inlined_call_operand.hbm [shape: f32[2,8,8,32], index: 0, kind: input, shape index: {}]
  %s1 = inlined_call_operand.hbm [shape: f32[9,32], index: 1, kind: input, shape index: {}]
  %s2 = inlined_call_operand.vmem [shape: f32[1,32], index: 2, kind: input, shape index: {}]
  %s3 = inlined_call_operand.hbm [shape: f32[2,8,8,32], index: 3, kind: output, shape index: {}]
  %s4 = sld [smem:[#allocation0]]
  $region53: #{tpu_custom_call.1} parent=0
    _
  %s6 = ssub.s32 1, %s4
  %s7 = scalar_select 0, %s6, %s4
  $region1: #{tpu_custom_call.1} parent=0
    #allocation2 [shape = 'u8[65536]{0}', space=vmem, size = 0x10000, scoped, tag = 'input window, operand 0']
    #allocation3 [shape = 's32[2]{0}', space=sflag, size = 0x8, scoped, tag = 'scoped memory for tpu_custom_call.1']
    #allocation4 [shape = 's32[2]{0}', space=sflag, size = 0x8, scoped, tag = 'scoped memory for tpu_custom_call.1']
    #allocation5 [shape = 'u8[8192]{0}', space=vmem, size = 0x2000, scoped, tag = 'input window, operand 1, single buffered']
    #allocation6 [shape = 's32[1]{0}', space=sflag, size = 0x4, scoped, tag = 'scoped memory for tpu_custom_call.1']
    #allocation7 [shape = 'u8[65536]{0}', space=vmem, size = 0x10000, scoped, tag = 'output window, operand 0']
    %8 = vsyncpa [#allocation3], 0
    %s9 = scalar_lea.sflag [#allocation3], 1
    %10 = vsyncpa %s9, 0
    %11 = vsyncpa [#allocation6], 0
    %12 = vsyncpa [#allocation4], 0
    %s13 = scalar_lea.sflag [#allocation4], 1
    %14 = vsyncpa %s13, 0
    loop: start=0, step=1, limit=4
    $region2: #{tpu_custom_call.1} parent=1 // loop_pre_header
      _
    $region3: #{tpu_custom_call.1} parent=1 // loop_header
      %s16 = sphi 0, %s20
      %p17 = scmp.ge.s32.totalorder %s16, 4
      %s23 = sphi 0, %s35
      %s24 = sphi 0, %s31
      %s25 = sphi 0, %s23
      %s26 = sphi 0, %s24
      %s27 = sphi 0, %s25
      %s28 = sphi 0, %s26
      %s40 = sphi 0, %s42
      %s43 = sphi 0, %s40
      %s44 = sphi 0, %s43
      %s60 = sphi 0, %s44
      %s66 = sphi 0, %s68
      %s69 = sphi 0, %s66
      %s70 = sphi 0, %s69
      %s86 = sphi 0, %s70
      %s92 = sphi 0, %s94
      %s95 = sphi 0, %s92
      %s96 = sphi 0, %s95
      %s112 = sphi 0, %s96
      %s120 = sphi 0, %s122
      %s123 = sphi 0, %s120
      %s124 = sphi 0, %s123
      %s140 = sphi 0, %s124
    $region4: #{tpu_custom_call.1} parent=1 // loop_header_branch
      %19 = sbr.rel (%p17) target = $region8
    $region5: #{tpu_custom_call.1} parent=1 // loop_body
      %s21 = ssub.s32 %s16, 1
      %s22 = ssub.s32 %s16, 2
      %s29 = sadd.s32 1, %s24
      %p30 = scmp.ge.s32.totalorder %s29, 1
      %s31 = scalar_select %p30, 0, %s29
      %s32 = sadd.s32 1, %s23
      %s33 = scalar_select %p30, %s32, %s23
      %p34 = scmp.ge.s32.totalorder %s33, 2
      %s35 = scalar_select %p34, 0, %s33
      %s36 = ssub.s32 %s23, %s35
      %s37 = ssub.s32 %s24, %s31
      %s38 = sor.u32 %s36, %s37
      %p39 = scmp.eq.s32.totalorder %s38, 0
      %s41 = sadd.s32 %s40, 1
      %s42 = scalar_select %p39, %s40, %s41
      %p45 = pneg %p39
      %p46 = scmp.eq.s32.totalorder %s16, 1
      %p47 = por %p45, %p46
      %p48 = scmp.ne.s32.totalorder %s40, %s43
      %p49 = scmp.eq.s32.totalorder %s16, 0
      %p50 = por %p48, %p49
      %p51 = scmp.ne.s32.totalorder %s40, %s43
      %p52 = scmp.eq.s32.totalorder %s21, 1
      %p53 = por %p51, %p52
      %p54 = scmp.ne.s32.totalorder %s43, %s44
      %p55 = scmp.eq.s32.totalorder %s21, 0
      %p56 = por %p54, %p55
      %p57 = scmp.ne.s32.totalorder %s43, %s44
      %p58 = scmp.eq.s32.totalorder %s22, 1
      %p59 = por %p57, %p58
      %p61 = scmp.ne.s32.totalorder %s44, %s60
      %p62 = scmp.eq.s32.totalorder %s22, 0
      %p63 = por %p61, %p62
      %s64 = ssub.s32 %s24, %s31
      %p65 = scmp.eq.s32.totalorder %s64, 0
      %s67 = sadd.s32 %s66, 1
      %s68 = scalar_select %p65, %s66, %s67
      %p71 = pneg %p65
      %p72 = scmp.eq.s32.totalorder %s16, 1
      %p73 = por %p71, %p72
      %p74 = scmp.ne.s32.totalorder %s66, %s69
      %p75 = scmp.eq.s32.totalorder %s16, 0
      %p76 = por %p74, %p75
      %p77 = scmp.ne.s32.totalorder %s66, %s69
      %p78 = scmp.eq.s32.totalorder %s21, 1
      %p79 = por %p77, %p78
      %p80 = scmp.ne.s32.totalorder %s69, %s70
      %p81 = scmp.eq.s32.totalorder %s21, 0
      %p82 = por %p80, %p81
      %p83 = scmp.ne.s32.totalorder %s69, %s70
      %p84 = scmp.eq.s32.totalorder %s22, 1
      %p85 = por %p83, %p84
      %p87 = scmp.ne.s32.totalorder %s70, %s86
      %p88 = scmp.eq.s32.totalorder %s22, 0
      %p89 = por %p87, %p88
      %s90 = ssub.s32 %s24, %s31
      %p91 = scmp.eq.s32.totalorder %s90, 0
      %s93 = sadd.s32 %s92, 1
      %s94 = scalar_select %p91, %s92, %s93
      %p97 = pneg %p91
      %p98 = scmp.eq.s32.totalorder %s16, 1
      %p99 = por %p97, %p98
      %p100 = scmp.ne.s32.totalorder %s92, %s95
      %p101 = scmp.eq.s32.totalorder %s16, 0
      %p102 = por %p100, %p101
      %p103 = scmp.ne.s32.totalorder %s92, %s95
      %p104 = scmp.eq.s32.totalorder %s21, 1
      %p105 = por %p103, %p104
      %p106 = scmp.ne.s32.totalorder %s95, %s96
      %p107 = scmp.eq.s32.totalorder %s21, 0
      %p108 = por %p106, %p107
      %p109 = scmp.ne.s32.totalorder %s95, %s96
      %p110 = scmp.eq.s32.totalorder %s22, 1
      %p111 = por %p109, %p110
      %p113 = scmp.ne.s32.totalorder %s96, %s112
      %p114 = scmp.eq.s32.totalorder %s22, 0
      %p115 = por %p113, %p114
      %s116 = ssub.s32 %s23, %s35
      %s117 = ssub.s32 %s24, %s31
      %s118 = sor.u32 %s116, %s117
      %p119 = scmp.eq.s32.totalorder %s118, 0
      %s121 = sadd.s32 %s120, 1
      %s122 = scalar_select %p119, %s120, %s121
      %p125 = pneg %p119
      %p126 = scmp.eq.s32.totalorder %s16, 1
      %p127 = por %p125, %p126
      %p128 = scmp.ne.s32.totalorder %s120, %s123
      %p129 = scmp.eq.s32.totalorder %s16, 0
      %p130 = por %p128, %p129
      %p131 = scmp.ne.s32.totalorder %s120, %s123
      %p132 = scmp.eq.s32.totalorder %s21, 1
      %p133 = por %p131, %p132
      %p134 = scmp.ne.s32.totalorder %s123, %s124
      %p135 = scmp.eq.s32.totalorder %s21, 0
      %p136 = por %p134, %p135
      %p137 = scmp.ne.s32.totalorder %s123, %s124
      %p138 = scmp.eq.s32.totalorder %s22, 1
      %p139 = por %p137, %p138
      %p141 = scmp.ne.s32.totalorder %s124, %s140
      %p142 = scmp.eq.s32.totalorder %s22, 0
      %p143 = por %p141, %p142
      %p144 = scmp.le.s32.totalorder 1, %s16
      %p145 = scmp.lt.s32.totalorder %s16, 3
      %p146 = pnand %p144, %p145
      %p147 = pneg %p146
      // Predicated region
      $region9: #{tpu_custom_call.1} parent=5 // pred_check
        _
      $region10: #{tpu_custom_call.1} parent=5 // pred_check_branch
        %149 = sbr.rel (%p146) target = $region12
      $region11: #{tpu_custom_call.1} parent=5 // pred_region
        %s150 = ssub.s32 %s16, 1
        // Predicated region
        $region13: #{tpu_custom_call.1} parent=11 // pred_check
          %p151 = pneg %p82
        $region14: #{tpu_custom_call.1} parent=11 // pred_check_branch
          %153 = sbr.rel (%p151) target = $region16
        $region15: #{tpu_custom_call.1} parent=11 // pred_region
          %155 = vsyncadd [#allocation6], 0
          %s156 = smul.addr %s26, 8
          %s157 = scalar_lea.hbm %s1, %s156
          %s158 = sshll.u32 %s157, 4
          %s159 = int_to_ptr.hbm [resolvable:$true] %s158
          %s160 = sshll.u32 [#allocation5], 4
          %s161 = int_to_ptr.vmem [resolvable:$true] %s160
          %166 = dma.hbm_to_vmem [thread:$0]  %s159, 256, %s161, [#allocation6], 128, 128, 8
        $region16: #{tpu_custom_call.1} parent=11 // pred_fallthru
          _
        // Predicated region
        $region17: #{tpu_custom_call.1} parent=11 // pred_check
          %p167 = pneg %p108
        $region18: #{tpu_custom_call.1} parent=11 // pred_check_branch
          %169 = sbr.rel (%p167) target = $region20
        $region19: #{tpu_custom_call.1} parent=11 // pred_region
          %p170 = scmp.lt.s32.totalorder %s26, 0
          %s171 = scalar_select %p170, %s26, 0
          %s172 = scalar_lea.vmem %s2, %s171
        $region20: #{tpu_custom_call.1} parent=11 // pred_fallthru
          _
      $region12: #{tpu_custom_call.1} parent=5 // pred_fallthru
        _
      %p173 = scmp.lt.s32.totalorder %s16, 2
      // Predicated region
      $region21: #{tpu_custom_call.1} parent=5 // pred_check
        %p174 = pneg %p173
      $region22: #{tpu_custom_call.1} parent=5 // pred_check_branch
        %176 = sbr.rel (%p174) target = $region24
      $region23: #{tpu_custom_call.1} parent=5 // pred_region
        // Predicated region
        $region25: #{tpu_custom_call.1} parent=23 // pred_check
          %p177 = pneg %p50
        $region26: #{tpu_custom_call.1} parent=23 // pred_check_branch
          %179 = sbr.rel (%p177) target = $region28
        $region27: #{tpu_custom_call.1} parent=23 // pred_region
          %s180 = sand.u32 %s40, 1
          %s181 = scalar_lea.sflag [#allocation3], %s180
          %s182 = sand.u32 %s40, 1
          %s183 = smul.addr %s182, 64
          %s184 = scalar_lea.vmem [#allocation2], %s183
          %186 = vsyncadd %s181, 0
          %s187 = smul.addr %s23, 8
          %s188 = sadd.s32 %s24, %s187
          %s189 = smul.addr %s188, 8
          %s190 = scalar_lea.hbm %s0, %s189
          %s191 = sshll.u32 %s190, 4
          %s192 = int_to_ptr.hbm [resolvable:$true] %s191
          %s193 = sshll.u32 %s184, 4
          %s194 = int_to_ptr.vmem [resolvable:$true] %s193
          %199 = dma.hbm_to_vmem [thread:$0]  %s192, 1024, %s194, %s181, 128, 128, 8
        $region28: #{tpu_custom_call.1} parent=23 // pred_fallthru
          _
      $region24: #{tpu_custom_call.1} parent=5 // pred_fallthru
        _
      %p200 = scmp.le.s32.totalorder 1, %s16
      %p201 = scmp.lt.s32.totalorder %s16, 3
      %p202 = pnand %p200, %p201
      %p203 = pneg %p202
      // Predicated region
      $region29: #{tpu_custom_call.1} parent=5 // pred_check
        _
      $region30: #{tpu_custom_call.1} parent=5 // pred_check_branch
        %205 = sbr.rel (%p202) target = $region32
      $region31: #{tpu_custom_call.1} parent=5 // pred_region
        %s206 = ssub.s32 %s16, 1
        %s207 = sand.u32 %s43, 1
        %s208 = scalar_lea.sflag [#allocation3], %s207
        %s209 = sand.u32 %s43, 1
        %s210 = smul.addr %s209, 64
        %s211 = scalar_lea.vmem [#allocation2], %s210
        // Predicated region
        $region33: #{tpu_custom_call.1} parent=31 // pred_check
          %p212 = pneg %p56
        $region34: #{tpu_custom_call.1} parent=31 // pred_check_branch
          %214 = sbr.rel (%p212) target = $region36
        $region35: #{tpu_custom_call.1} parent=31 // pred_region
          %216 = dma.done %s208, 1024
        $region36: #{tpu_custom_call.1} parent=31 // pred_fallthru
          _
        // Predicated region
        $region37: #{tpu_custom_call.1} parent=31 // pred_check
          %p217 = pneg %p82
        $region38: #{tpu_custom_call.1} parent=31 // pred_check_branch
          %219 = sbr.rel (%p217) target = $region40
        $region39: #{tpu_custom_call.1} parent=31 // pred_region
          %221 = dma.done [#allocation6], 256
        $region40: #{tpu_custom_call.1} parent=31 // pred_fallthru
          _
        %s222 = sand.u32 %s43, 1
        %s223 = scalar_lea.sflag [#allocation3], %s222
        %s224 = sand.u32 %s43, 1
        %s225 = smul.addr %s224, 64
        %s226 = scalar_lea.vmem [#allocation2], %s225
        %p227 = pneg %p56
        %p228 = pneg %p53
        %p229 = pneg %p82
        %p230 = pneg %p79
        %p231 = scmp.lt.s32.totalorder %s26, 0
        %s232 = scalar_select %p231, %s26, 0
        %s233 = scalar_lea.vmem %s2, %s232
        %p234 = pneg %p108
        %p235 = pneg %p105
        %p236 = pneg %p136
        %p237 = pneg %p133
        %s238 = sand.u32 %s123, 1
        %s239 = scalar_lea.sflag [#allocation4], %s238
        %s240 = sand.u32 %s123, 1
        %s241 = smul.addr %s240, 64
        %s242 = scalar_lea.vmem [#allocation7], %s241
        %p243 = scmp.lt.s32.totalorder %s26, 0
        %s244 = scalar_select %p243, %s26, 0
        %s245 = scalar_lea.vmem %s2, %s244
        %v246 = vld [vmem:[%s211] sm:$0xff]
        %v247 = vld [vmem:[%s211 + $0x8] sm:$0xff]
        %v248 = vld [vmem:[%s211 + $0x10] sm:$0xff]
        %v249 = vld [vmem:[%s211 + $0x18] sm:$0xff]
        %v250 = vld [vmem:[%s211 + $0x20] sm:$0xff]
        %v251 = vld [vmem:[%s211 + $0x28] sm:$0xff]
        %v252 = vld [vmem:[%s211 + $0x30] sm:$0xff]
        %v253 = vld [vmem:[%s211 + $0x38] sm:$0xff]
        %v254 = vld [vmem:[#allocation5] sm:$0xff]
        %v255 = vld [vmem:[#allocation5 + $0x8] sm:$0x1]
        %v256 = vld [vmem:[%s245] sm:$0x1]
        %v265 = vrot.slane %v246, 7
        %v266 = vrot.slane %v247, 7
        %v267 = vrot.slane %v248, 7
        %v268 = vrot.slane %v249, 7
        %v269 = vrot.slane %v250, 7
        %v270 = vrot.slane %v251, 7
        %v271 = vrot.slane %v252, 7
        %v272 = vrot.slane %v253, 7
        %vm281 = vcmask 1040384
        %v282 = vsel %vm281, 0.0, %v265
        %v283 = vsel %vm281, 0.0, %v266
        %v284 = vsel %vm281, 0.0, %v267
        %v285 = vsel %vm281, 0.0, %v268
        %v286 = vsel %vm281, 0.0, %v269
        %v287 = vsel %vm281, 0.0, %v270
        %v288 = vsel %vm281, 0.0, %v271
        %v289 = vsel %vm281, 0.0, %v272
        %v290 = vrot.slane %v246, 1
        %v291 = vrot.slane %v247, 1
        %v292 = vrot.slane %v248, 1
        %v293 = vrot.slane %v249, 1
        %v294 = vrot.slane %v250, 1
        %v295 = vrot.slane %v251, 1
        %v296 = vrot.slane %v252, 1
        %v297 = vrot.slane %v253, 1
        %vm306 = vcmask 1046528
        %v307 = vsel %vm306, %v290, 0.0
        %v308 = vsel %vm306, %v291, 0.0
        %v309 = vsel %vm306, %v292, 0.0
        %v310 = vsel %vm306, %v293, 0.0
        %v311 = vsel %vm306, %v294, 0.0
        %v312 = vsel %vm306, %v295, 0.0
        %v313 = vsel %vm306, %v296, 0.0
        %v314 = vsel %vm306, %v297, 0.0
        %v316 = vperm.slane %v256, 0
        %v318 = vadd.f32 %v246, %v316
        %v319 = vadd.f32 %v247, %v316
        %v320 = vadd.f32 %v248, %v316
        %v321 = vadd.f32 %v249, %v316
        %v322 = vadd.f32 %v250, %v316
        %v323 = vadd.f32 %v251, %v316
        %v324 = vadd.f32 %v252, %v316
        %v325 = vadd.f32 %v253, %v316
        %v326 = vperm.slane %v254, 0
        %v327 = vmul.f32 %v282, %v326
        %v328 = vmul.f32 %v283, %v326
        %v329 = vmul.f32 %v284, %v326
        %v330 = vmul.f32 %v285, %v326
        %v331 = vmul.f32 %v286, %v326
        %v332 = vmul.f32 %v287, %v326
        %v333 = vmul.f32 %v288, %v326
        %v334 = vperm.slane %v254, 1
        %v335 = vmul.f32 %v246, %v334
        %v336 = vmul.f32 %v247, %v334
        %v337 = vmul.f32 %v248, %v334
        %v338 = vmul.f32 %v249, %v334
        %v339 = vmul.f32 %v250, %v334
        %v340 = vmul.f32 %v251, %v334
        %v341 = vmul.f32 %v252, %v334
        %v342 = vadd.f32 %v327, %v335
        %v343 = vadd.f32 %v328, %v336
        %v344 = vadd.f32 %v329, %v337
        %v345 = vadd.f32 %v330, %v338
        %v346 = vadd.f32 %v331, %v339
        %v347 = vadd.f32 %v332, %v340
        %v348 = vadd.f32 %v333, %v341
        %v349 = vperm.slane %v254, 2
        %v350 = vmul.f32 %v307, %v349
        %v351 = vmul.f32 %v308, %v349
        %v352 = vmul.f32 %v309, %v349
        %v353 = vmul.f32 %v310, %v349
        %v354 = vmul.f32 %v311, %v349
        %v355 = vmul.f32 %v312, %v349
        %v356 = vmul.f32 %v313, %v349
        %v357 = vadd.f32 %v342, %v350
        %v358 = vadd.f32 %v343, %v351
        %v359 = vadd.f32 %v344, %v352
        %v360 = vadd.f32 %v345, %v353
        %v361 = vadd.f32 %v346, %v354
        %v362 = vadd.f32 %v347, %v355
        %v363 = vadd.f32 %v348, %v356
        %v364 = vadd.f32 %v318, 0.0
        %v365 = vadd.f32 %v319, %v357
        %v366 = vadd.f32 %v320, %v358
        %v367 = vadd.f32 %v321, %v359
        %v368 = vadd.f32 %v322, %v360
        %v369 = vadd.f32 %v323, %v361
        %v370 = vadd.f32 %v324, %v362
        %v371 = vadd.f32 %v325, %v363
        %v372 = vperm.slane %v254, 3
        %v373 = vmul.f32 %v282, %v372
        %v374 = vmul.f32 %v283, %v372
        %v375 = vmul.f32 %v284, %v372
        %v376 = vmul.f32 %v285, %v372
        %v377 = vmul.f32 %v286, %v372
        %v378 = vmul.f32 %v287, %v372
        %v379 = vmul.f32 %v288, %v372
        %v380 = vmul.f32 %v289, %v372
        %v381 = vperm.slane %v254, 4
        %v382 = vmul.f32 %v246, %v381
        %v383 = vmul.f32 %v247, %v381
        %v384 = vmul.f32 %v248, %v381
        %v385 = vmul.f32 %v249, %v381
        %v386 = vmul.f32 %v250, %v381
        %v387 = vmul.f32 %v251, %v381
        %v388 = vmul.f32 %v252, %v381
        %v389 = vmul.f32 %v253, %v381
        %v390 = vadd.f32 %v373, %v382
        %v391 = vadd.f32 %v374, %v383
        %v392 = vadd.f32 %v375, %v384
        %v393 = vadd.f32 %v376, %v385
        %v394 = vadd.f32 %v377, %v386
        %v395 = vadd.f32 %v378, %v387
        %v396 = vadd.f32 %v379, %v388
        %v397 = vadd.f32 %v380, %v389
        %v398 = vperm.slane %v254, 5
        %v399 = vmul.f32 %v307, %v398
        %v400 = vmul.f32 %v308, %v398
        %v401 = vmul.f32 %v309, %v398
        %v402 = vmul.f32 %v310, %v398
        %v403 = vmul.f32 %v311, %v398
        %v404 = vmul.f32 %v312, %v398
        %v405 = vmul.f32 %v313, %v398
        %v406 = vmul.f32 %v314, %v398
        %v407 = vadd.f32 %v390, %v399
        %v408 = vadd.f32 %v391, %v400
        %v409 = vadd.f32 %v392, %v401
        %v410 = vadd.f32 %v393, %v402
        %v411 = vadd.f32 %v394, %v403
        %v412 = vadd.f32 %v395, %v404
        %v413 = vadd.f32 %v396, %v405
        %v414 = vadd.f32 %v397, %v406
        %v415 = vadd.f32 %v364, %v407
        %v416 = vadd.f32 %v365, %v408
        %v417 = vadd.f32 %v366, %v409
        %v418 = vadd.f32 %v367, %v410
        %v419 = vadd.f32 %v368, %v411
        %v420 = vadd.f32 %v369, %v412
        %v421 = vadd.f32 %v370, %v413
        %v422 = vadd.f32 %v371, %v414
        %v423 = vperm.slane %v254, 6
        %v424 = vmul.f32 %v283, %v423
        %v425 = vmul.f32 %v284, %v423
        %v426 = vmul.f32 %v285, %v423
        %v427 = vmul.f32 %v286, %v423
        %v428 = vmul.f32 %v287, %v423
        %v429 = vmul.f32 %v288, %v423
        %v430 = vmul.f32 %v289, %v423
        %v431 = vperm.slane %v254, 7
        %v432 = vmul.f32 %v247, %v431
        %v433 = vmul.f32 %v248, %v431
        %v434 = vmul.f32 %v249, %v431
        %v435 = vmul.f32 %v250, %v431
        %v436 = vmul.f32 %v251, %v431
        %v437 = vmul.f32 %v252, %v431
        %v438 = vmul.f32 %v253, %v431
        %v439 = vadd.f32 %v424, %v432
        %v440 = vadd.f32 %v425, %v433
        %v441 = vadd.f32 %v426, %v434
        %v442 = vadd.f32 %v427, %v435
        %v443 = vadd.f32 %v428, %v436
        %v444 = vadd.f32 %v429, %v437
        %v445 = vadd.f32 %v430, %v438
        %v446 = vperm.slane %v255, 0
        %v447 = vmul.f32 %v308, %v446
        %v448 = vmul.f32 %v309, %v446
        %v449 = vmul.f32 %v310, %v446
        %v450 = vmul.f32 %v311, %v446
        %v451 = vmul.f32 %v312, %v446
        %v452 = vmul.f32 %v313, %v446
        %v453 = vmul.f32 %v314, %v446
        %v454 = vadd.f32 %v439, %v447
        %v455 = vadd.f32 %v440, %v448
        %v456 = vadd.f32 %v441, %v449
        %v457 = vadd.f32 %v442, %v450
        %v458 = vadd.f32 %v443, %v451
        %v459 = vadd.f32 %v444, %v452
        %v460 = vadd.f32 %v445, %v453
        %v461 = vadd.f32 %v415, %v454
        %v462 = vadd.f32 %v416, %v455
        %v463 = vadd.f32 %v417, %v456
        %v464 = vadd.f32 %v418, %v457
        %v465 = vadd.f32 %v419, %v458
        %v466 = vadd.f32 %v420, %v459
        %v467 = vadd.f32 %v421, %v460
        %v468 = vadd.f32 %v422, 0.0
        %vm469 = vcmask 261120
        %470 = vst.msk [vmem:[%s242] sm:$0xff] %vm469, %v461
        %471 = vst.msk [vmem:[%s242 + $0x8] sm:$0xff] %vm469, %v462
        %472 = vst.msk [vmem:[%s242 + $0x10] sm:$0xff] %vm469, %v463
        %473 = vst.msk [vmem:[%s242 + $0x18] sm:$0xff] %vm469, %v464
        %474 = vst.msk [vmem:[%s242 + $0x20] sm:$0xff] %vm469, %v465
        %475 = vst.msk [vmem:[%s242 + $0x28] sm:$0xff] %vm469, %v466
        %476 = vst.msk [vmem:[%s242 + $0x30] sm:$0xff] %vm469, %v467
        %477 = vst.msk [vmem:[%s242 + $0x38] sm:$0xff] %vm469, %v468
        %s478 = sand.u32 %s123, 1
        %s479 = scalar_lea.sflag [#allocation4], %s478
        %s480 = sand.u32 %s123, 1
        %s481 = smul.addr %s480, 64
        %s482 = scalar_lea.vmem [#allocation7], %s481
        // Predicated region
        $region41: #{tpu_custom_call.1} parent=31 // pred_check
          %p483 = pneg %p133
        $region42: #{tpu_custom_call.1} parent=31 // pred_check_branch
          %485 = sbr.rel (%p483) target = $region44
        $region43: #{tpu_custom_call.1} parent=31 // pred_region
          %487 = vsyncadd %s479, 0
          %s488 = smul.addr %s25, 8
          %s489 = sadd.s32 %s26, %s488
          %s490 = smul.addr %s489, 8
          %s491 = scalar_lea.hbm %s3, %s490
          %s492 = sshll.u32 %s482, 4
          %s493 = int_to_ptr.vmem [resolvable:$true] %s492
          %s494 = sshll.u32 %s491, 4
          %s495 = int_to_ptr.hbm [resolvable:$true] %s494
          %500 = dma.vmem_to_hbm [thread:$0]  %s493, 1024, %s495, %s479, 128, 128, 8
        $region44: #{tpu_custom_call.1} parent=31 // pred_fallthru
          _
      $region32: #{tpu_custom_call.1} parent=5 // pred_fallthru
        _
      %p501 = scmp.le.s32.totalorder 2, %s16
      // Predicated region
      $region45: #{tpu_custom_call.1} parent=5 // pred_check
        %p502 = pneg %p501
      $region46: #{tpu_custom_call.1} parent=5 // pred_check_branch
        %504 = sbr.rel (%p502) target = $region48
      $region47: #{tpu_custom_call.1} parent=5 // pred_region
        %s505 = ssub.s32 %s16, 2
        // Predicated region
        $region49: #{tpu_custom_call.1} parent=47 // pred_check
          %p506 = pneg %p139
        $region50: #{tpu_custom_call.1} parent=47 // pred_check_branch
          %508 = sbr.rel (%p506) target = $region52
        $region51: #{tpu_custom_call.1} parent=47 // pred_region
          %s509 = sand.u32 %s124, 1
          %s510 = scalar_lea.sflag [#allocation4], %s509
          %s511 = sand.u32 %s124, 1
          %s512 = smul.addr %s511, 64
          %s513 = scalar_lea.vmem [#allocation7], %s512
          %515 = dma.done %s510, 1024
        $region52: #{tpu_custom_call.1} parent=47 // pred_fallthru
          _
      $region48: #{tpu_custom_call.1} parent=5 // pred_fallthru
        _
    $region6: #{tpu_custom_call.1} parent=1 // loop_footer
      %s20 = sadd.s32 1, %s16
    $region7: #{tpu_custom_call.1} parent=1 // loop_footer_branch
      %15 = sbr.rel target = $region3
    $region8: #{tpu_custom_call.1} parent=1 // loop_exit
      _
    %516 = vsyncpa [#allocation3], 1
    %s517 = scalar_lea.sflag [#allocation3], 1
    %518 = vsyncpa %s517, 1
    %519 = vsyncpa [#allocation6], 1
    %520 = vsyncpa [#allocation4], 1
    %s521 = scalar_lea.sflag [#allocation4], 1
    %522 = vsyncpa %s521, 1

</llo_original>
